<compile_context>
chip_gen: v5e
topology: v5e:2x2
jax: 0.10.0
libtpu: 0.0.40
codegen_flags: <defaults>
</compile_context>

<pallas_src>
import functools

import jax
import jax.numpy as jnp
from jax.experimental import pallas as pl
from jax.experimental.pallas import tpu as pltpu

_LANE = 128


def _round_up(n, m):
    return ((n + m - 1) // m) * m


# --------------------------------------------------------------------------
# Kernel
# --------------------------------------------------------------------------
def mlp_logsoftmax_kernel(x_ref, w1_ref, b1_ref, w2_ref, b2_ref,
                          w3_ref, b3_ref, o_ref, *, num_classes):
    """Fused MLP forward for one batch tile: Linear+ReLU, Linear+ReLU,
    Linear, LogSoftmax over the (lane-padded) class dim.

    Matmuls run bf16 x bf16 -> f32 on the MXU; bias add / ReLU / log-softmax
    stay in f32 (v5e VPU/EUP have no bf16 path)."""
    x = x_ref[...].astype(jnp.bfloat16)                       # (tm, F)

    # Hidden layer 1: Linear + ReLU (padded H1 lanes -> ReLU(0+0) = 0).
    h1 = jnp.dot(x, w1_ref[...], preferred_element_type=jnp.float32) + b1_ref[...]
    h1 = jnp.maximum(h1, 0.0).astype(jnp.bfloat16)

    # Hidden layer 2: Linear + ReLU (padded H2 lanes stay exactly zero).
    h2 = jnp.dot(h1, w2_ref[...], preferred_element_type=jnp.float32) + b2_ref[...]
    h2 = jnp.maximum(h2, 0.0).astype(jnp.bfloat16)

    # Output layer: Linear.
    logits = jnp.dot(h2, w3_ref[...], preferred_element_type=jnp.float32) + b3_ref[...]

    # Mask padded class lanes so they contribute exp(.) == 0 to the
    # normalizer (iota mask is robust even if the epilogue dtype changes).
    if num_classes < logits.shape[-1]:
        lane = jax.lax.broadcasted_iota(jnp.int32, logits.shape, 1)
        logits = jnp.where(lane < num_classes, logits, -1e30)

    # Numerically stable LogSoftmax along the class (last) dim.
    m = jnp.max(logits, axis=-1, keepdims=True)
    shifted = logits - m
    lse = jnp.log(jnp.sum(jnp.exp(shifted), axis=-1, keepdims=True))
    o_ref[...] = (shifted - lse).astype(o_ref.dtype)


# --------------------------------------------------------------------------
# One-time parameter preparation (hoisted out of the forward path)
# --------------------------------------------------------------------------
def prepare_params(params):
    """Pads the lane (output-feature) dims to multiples of 128 and casts the
    weights to bf16.  Call ONCE after init / checkpoint load; the result is
    reused by every forward call, so no per-call padding/cast passes remain.

    The contraction (K) dim of w1 is deliberately left at its natural size so
    the activations never need feature-dim padding."""
    w1, b1, w2, b2, w3, b3 = params
    F, H1 = w1.shape
    H2 = w2.shape[1]
    C = w3.shape[1]
    H1p, H2p, Cp = (_round_up(H1, _LANE), _round_up(H2, _LANE),
                    _round_up(C, _LANE))
    bf16, f32 = jnp.bfloat16, jnp.float32

    w1p = jnp.zeros((F, H1p), bf16).at[:, :H1].set(w1.astype(bf16))
    b1p = jnp.zeros((1, H1p), f32).at[:, :H1].set(b1.astype(f32))
    w2p = jnp.zeros((H1p, H2p), bf16).at[:H1, :H2].set(w2.astype(bf16))
    b2p = jnp.zeros((1, H2p), f32).at[:, :H2].set(b2.astype(f32))
    w3p = jnp.zeros((H2p, Cp), bf16).at[:H2, :C].set(w3.astype(bf16))
    b3p = jnp.zeros((1, Cp), f32).at[:, :C].set(b3.astype(f32))
    return (w1p, b1p, w2p, b2p, w3p, b3p)


# --------------------------------------------------------------------------
# Generation-aware tile / VMEM configuration
# --------------------------------------------------------------------------
def _select_config(B, F, H1p, H2p, Cp):
    """Pick batch tile (multiple of 16) and a VMEM limit per TPU generation."""
    kind = ""
    try:
        kind = jax.devices()[0].device_kind.lower()
    except Exception:  # pragma: no cover - defensive; keep defaults
        pass
    is_v7 = ("v7" in kind) or ("7x" in kind)
    is_v6 = "v6" in kind
    is_v5 = "v5" in kind

    if is_v5:            # 128x128 MXU, 16 MiB default scoped VMEM -> raise it
        tm, budget = 128, 96 << 20
    elif is_v7:          # 64 MiB physical VMEM, 2 TensorCores
        tm, budget = 256, 44 << 20
    elif is_v6:          # 128 MiB VMEM; bigger tiles amortize per-step cost
        tm, budget = 512, 96 << 20
    else:
        tm, budget = 256, 64 << 20

    # v7x: guarantee >= 2 grid steps so the "parallel" axis uses both TCs.
    if is_v7:
        tm = min(tm, max(16, _round_up(pl.cdiv(B, 2), 16)))
    # Never use a tile larger than the (16-rounded) batch.
    tm = min(tm, max(16, _round_up(B, 16)))

    w_bytes = 2 * (F * H1p + H1p * H2p + H2p * Cp) + 4 * (H1p + H2p + Cp)

    def need(t):
        return (2 * t * F * 4            # x, double-buffered, f32
                + 2 * t * Cp * 4         # out, double-buffered, f32
                + 2 * w_bytes            # weights/biases (worst case 2 bufs)
                + t * (H1p + H2p + Cp) * 6)  # live activation temporaries

    # Shrink the tile until the working set fits the per-generation budget.
    # TODO(synk): for very large input_size where w1 alone exceeds the VMEM
    # budget, a K-grid over F with an f32 accumulator scratch would be needed.
    while tm > 16 and need(tm) > budget:
        tm = max(16, _round_up(tm // 2, 16))

    vmem_limit = int(min(max(2 * need(tm), 32 << 20), budget))
    return tm, vmem_limit, w_bytes


# --------------------------------------------------------------------------
# Forward wrapper
# --------------------------------------------------------------------------
def audio_classifier_forward(x, prepared, num_classes, *, tm=None):
    """Runs the fused Pallas kernel.

    x:        (B, input_size) float32 (or bf16).
    prepared: output of prepare_params() (padded bf16 weights, f32 biases).
    Returns (B, num_classes) float32 log-probabilities.

    Note: for tiny batches (B <= ~64) with small input_size, the plain fused
    XLA path (reference_forward) has lower fixed overhead; the Pallas path is
    used unconditionally here to exercise the kernel."""
    w1p, b1p, w2p, b2p, w3p, b3p = prepared
    B, F = x.shape
    H1p = w1p.shape[1]
    H2p = w2p.shape[1]
    Cp = w3p.shape[1]
    assert w1p.shape[0] == F, "prepared params do not match x feature dim"

    tm_sel, vmem_limit, w_bytes = _select_config(B, F, H1p, H2p, Cp)
    if tm is not None:
        tm_sel = max(16, _round_up(min(tm, max(16, _round_up(B, 16))), 16))

    # Only the batch dim may need padding (to a tile multiple); the feature
    # dim is passed at its natural size, so no per-call f32->bf16 / 128-pad
    # materialization of x.
    Bp = _round_up(B, tm_sel)
    if Bp != B:
        x = jnp.pad(x, ((0, Bp - B), (0, 0)))
    grid = (Bp // tm_sel,)

    # Replicated-block specs for weights/biases.  Single-buffer them only when
    # they are big enough for the VMEM saving to matter.
    single_buffer = (w_bytes > (4 << 20)) and hasattr(pl, "Buffered")

    def rep_spec(shape):
        imap = lambda i: (0, 0)
        if single_buffer:
            return pl.BlockSpec(shape, imap, pipeline_mode=pl.Buffered(1))
        return pl.BlockSpec(shape, imap)

    cost = pl.CostEstimate(
        flops=2 * Bp * (F * H1p + H1p * H2p + H2p * Cp),
        transcendentals=Bp * (Cp + 1),
        bytes_accessed=(Bp * F * x.dtype.itemsize + w_bytes + Bp * Cp * 4),
    )

    kernel = functools.partial(mlp_logsoftmax_kernel, num_classes=num_classes)

    out = pl.pallas_call(
        kernel,
        out_shape=jax.ShapeDtypeStruct((Bp, Cp), jnp.float32),
        grid=grid,
        in_specs=[
            pl.BlockSpec((tm_sel, F), lambda i: (i, 0)),   # x: tiled over batch
            rep_spec((F, H1p)), rep_spec((1, H1p)),        # w1, b1
            rep_spec((H1p, H2p)), rep_spec((1, H2p)),      # w2, b2
            rep_spec((H2p, Cp)), rep_spec((1, Cp)),        # w3, b3
        ],
        out_specs=pl.BlockSpec((tm_sel, Cp), lambda i: (i, 0)),
        compiler_params=pltpu.CompilerParams(
            dimension_semantics=("parallel",),
            vmem_limit_bytes=vmem_limit),
        cost_estimate=cost,
    )(x, w1p, b1p, w2p, b2p, w3p, b3p)

    # Strip batch / class padding in the wrapper (the kernel's store stays
    # lane-dense, which is the cheap place for it).
    return out[:B, :num_classes]


# --------------------------------------------------------------------------
# Init + pure-JAX reference
# --------------------------------------------------------------------------
def init_params(key, input_size, num_classes, hidden_layers=(128, 64)):
    """Deterministic synthetic init mirroring nn.Linear shapes.
    Weights stored transposed: (in_features, out_features)."""
    sizes = [input_size, *hidden_layers, num_classes]
    params = []
    for i in range(len(sizes) - 1):
        fan_in, fan_out = sizes[i], sizes[i + 1]
        key, wk, bk = jax.random.split(key, 3)
        bound = 1.0 / jnp.sqrt(fan_in)
        w = jax.random.uniform(wk, (fan_in, fan_out), jnp.float32, -bound, bound)
        b = jax.random.uniform(bk, (1, fan_out), jnp.float32, -bound, bound)
        params.extend([w, b])
    return tuple(params)


def reference_forward(x, params):
    """Pure-JAX reference using the same bf16-matmul / f32-accumulate recipe
    as the kernel, for apples-to-apples correctness checking."""
    w1, b1, w2, b2, w3, b3 = params
    bf16 = jnp.bfloat16
    h1 = jnp.dot(x.astype(bf16), w1.astype(bf16),
                 preferred_element_type=jnp.float32) + b1
    h1 = jnp.maximum(h1, 0.0)
    h2 = jnp.dot(h1.astype(bf16), w2.astype(bf16),
                 preferred_element_type=jnp.float32) + b2
    h2 = jnp.maximum(h2, 0.0)
    logits = jnp.dot(h2.astype(bf16), w3.astype(bf16),
                     preferred_element_type=jnp.float32) + b3
    return jax.nn.log_softmax(logits, axis=1)


if __name__ == "__main__":
    # Small shapes consistent with the module's forward: (batch, input_size)
    batch = 8
    input_size = 32
    num_classes = 10
    hidden_layers = (128, 64)

    key = jax.random.PRNGKey(0)
    key, xk = jax.random.split(key)
    x = jax.random.normal(xk, (batch, input_size), jnp.float32)
    params = init_params(key, input_size, num_classes, hidden_layers)

    # One-time weight padding / bf16 cast (hoisted out of the forward path).
    prepared = prepare_params(params)

    fwd = jax.jit(functools.partial(audio_classifier_forward,
                                    num_classes=num_classes))
    out = jax.block_until_ready(fwd(x, prepared))

    ref = reference_forward(x, params)
    assert out.shape == (batch, num_classes), out.shape
    assert bool(jnp.all(jnp.isfinite(out))), "non-finite output"
    assert jnp.allclose(out, ref, atol=1e-3, rtol=1e-3), "mismatch vs reference"

    print("KERNEL_OK")
</pallas_src>

<mosaic_0001>
module attributes {stable_mosaic.version = 11 : i64} {
  func.func @mlp_logsoftmax_kernel(%arg0: i32, %arg1: memref<16x32xf32, #tpu.memory_space<vmem>>, %arg2: memref<32x128xbf16, #tpu.memory_space<vmem>>, %arg3: memref<1x128xf32, #tpu.memory_space<vmem>>, %arg4: memref<128x128xbf16, #tpu.memory_space<vmem>>, %arg5: memref<1x128xf32, #tpu.memory_space<vmem>>, %arg6: memref<128x128xbf16, #tpu.memory_space<vmem>>, %arg7: memref<1x128xf32, #tpu.memory_space<vmem>>, %arg8: memref<16x128xf32, #tpu.memory_space<vmem>>) attributes {dimension_semantics = [#tpu.dimension_semantics<parallel>], iteration_bounds = array<i64: 1>, scalar_prefetch = 0 : i64, scratch_operands = 0 : i64, tpu.core_type = #tpu.core_type<tc>, window_params = [{transform_indices = @transform_0, window_bounds = array<i64: 16, 32>}, {pipeline_mode = #tpu.pipeline_mode<synchronous>, transform_indices = @transform_1, window_bounds = array<i64: 32, 128>}, {pipeline_mode = #tpu.pipeline_mode<synchronous>, transform_indices = @transform_2, window_bounds = array<i64: 1, 128>}, {pipeline_mode = #tpu.pipeline_mode<synchronous>, transform_indices = @transform_3, window_bounds = array<i64: 128, 128>}, {pipeline_mode = #tpu.pipeline_mode<synchronous>, transform_indices = @transform_4, window_bounds = array<i64: 1, 128>}, {pipeline_mode = #tpu.pipeline_mode<synchronous>, transform_indices = @transform_5, window_bounds = array<i64: 128, 128>}, {pipeline_mode = #tpu.pipeline_mode<synchronous>, transform_indices = @transform_6, window_bounds = array<i64: 1, 128>}, {transform_indices = @transform_7, window_bounds = array<i64: 16, 128>}]} {
    %c0 = arith.constant 0 : index
    %c0_0 = arith.constant 0 : index
    %0 = vector.load %arg1[%c0, %c0_0] : memref<16x32xf32, #tpu.memory_space<vmem>>, vector<16x32xf32>
    %1 = arith.truncf %0 : vector<16x32xf32> to vector<16x32xbf16>
    %c0_1 = arith.constant 0 : index
    %c0_2 = arith.constant 0 : index
    %2 = vector.load %arg2[%c0_1, %c0_2] : memref<32x128xbf16, #tpu.memory_space<vmem>>, vector<32x128xbf16>
    %cst = arith.constant dense<0.000000e+00> : vector<16x128xf32>
    %3 = tpu.matmul %1, %2, %cst {dimension_numbers = #tpu.dot_dimension_numbers<[1], [0], [0], [1], [0, 0, 1, 1], [], []>} : vector<16x32xbf16>, vector<32x128xbf16>, vector<16x128xf32> -> vector<16x128xf32>
    %c0_3 = arith.constant 0 : index
    %c0_4 = arith.constant 0 : index
    %4 = vector.load %arg3[%c0_3, %c0_4] : memref<1x128xf32, #tpu.memory_space<vmem>>, vector<1x128xf32>
    %5 = vector.broadcast %4 : vector<1x128xf32> to vector<16x128xf32>
    %6 = arith.addf %3, %5 : vector<16x128xf32>
    %cst_5 = arith.constant 0.000000e+00 : f32
    %7 = vector.broadcast %cst_5 : f32 to vector<16x128xf32>
    %8 = arith.maximumf %6, %7 : vector<16x128xf32>
    %9 = arith.truncf %8 : vector<16x128xf32> to vector<16x128xbf16>
    %c0_6 = arith.constant 0 : index
    %c0_7 = arith.constant 0 : index
    %10 = vector.load %arg4[%c0_6, %c0_7] : memref<128x128xbf16, #tpu.memory_space<vmem>>, vector<128x128xbf16>
    %cst_8 = arith.constant dense<0.000000e+00> : vector<16x128xf32>
    %11 = tpu.matmul %9, %10, %cst_8 {dimension_numbers = #tpu.dot_dimension_numbers<[1], [0], [0], [1], [0, 0, 1, 1], [], []>} : vector<16x128xbf16>, vector<128x128xbf16>, vector<16x128xf32> -> vector<16x128xf32>
    %c0_9 = arith.constant 0 : index
    %c0_10 = arith.constant 0 : index
    %12 = vector.load %arg5[%c0_9, %c0_10] : memref<1x128xf32, #tpu.memory_space<vmem>>, vector<1x128xf32>
    %13 = vector.broadcast %12 : vector<1x128xf32> to vector<16x128xf32>
    %14 = arith.addf %11, %13 : vector<16x128xf32>
    %cst_11 = arith.constant 0.000000e+00 : f32
    %15 = vector.broadcast %cst_11 : f32 to vector<16x128xf32>
    %16 = arith.maximumf %14, %15 : vector<16x128xf32>
    %17 = arith.truncf %16 : vector<16x128xf32> to vector<16x128xbf16>
    %c0_12 = arith.constant 0 : index
    %c0_13 = arith.constant 0 : index
    %18 = vector.load %arg6[%c0_12, %c0_13] : memref<128x128xbf16, #tpu.memory_space<vmem>>, vector<128x128xbf16>
    %cst_14 = arith.constant dense<0.000000e+00> : vector<16x128xf32>
    %19 = tpu.matmul %17, %18, %cst_14 {dimension_numbers = #tpu.dot_dimension_numbers<[1], [0], [0], [1], [0, 0, 1, 1], [], []>} : vector<16x128xbf16>, vector<128x128xbf16>, vector<16x128xf32> -> vector<16x128xf32>
    %c0_15 = arith.constant 0 : index
    %c0_16 = arith.constant 0 : index
    %20 = vector.load %arg7[%c0_15, %c0_16] : memref<1x128xf32, #tpu.memory_space<vmem>>, vector<1x128xf32>
    %21 = vector.broadcast %20 : vector<1x128xf32> to vector<16x128xf32>
    %22 = arith.addf %19, %21 : vector<16x128xf32>
    %23 = tpu.iota {dimensions = array<i32: 1>} : vector<16x128xi32>
    %c10_i32 = arith.constant 10 : i32
    %24 = vector.broadcast %c10_i32 : i32 to vector<16x128xi32>
    %25 = arith.cmpi slt, %23, %24 : vector<16x128xi32>
    %cst_17 = arith.constant -1.000000e+30 : f32
    %26 = vector.broadcast %cst_17 : f32 to vector<16x128xf32>
    %27 = arith.select %25, %22, %26 : vector<16x128xi1>, vector<16x128xf32>
    %cst_18 = arith.constant dense<0xFF800000> : vector<16xf32>
    %28 = vector.multi_reduction <maximumf>, %27, %cst_18 [1] : vector<16x128xf32> to vector<16xf32>
    %29 = vector.shape_cast %28 : vector<16xf32> to vector<16x1xf32>
    %30 = vector.broadcast %29 : vector<16x1xf32> to vector<16x128xf32>
    %31 = arith.subf %27, %30 : vector<16x128xf32>
    %32 = math.exp %31 : vector<16x128xf32>
    %cst_19 = arith.constant dense<0.000000e+00> : vector<16xf32>
    %33 = vector.multi_reduction <add>, %32, %cst_19 [1] : vector<16x128xf32> to vector<16xf32>
    %34 = vector.shape_cast %33 : vector<16xf32> to vector<16x1xf32>
    %35 = math.log %34 : vector<16x1xf32>
    %36 = vector.broadcast %35 : vector<16x1xf32> to vector<16x128xf32>
    %37 = arith.subf %31, %36 : vector<16x128xf32>
    %c0_20 = arith.constant 0 : index
    %c0_21 = arith.constant 0 : index
    %38 = vector.load %arg8[%c0_20, %c0_21] : memref<16x128xf32, #tpu.memory_space<vmem>>, vector<16x128xf32>
    tpu.vector_store %arg8[%c0_20, %c0_21], %37 {strides = array<i32>} : memref<16x128xf32, #tpu.memory_space<vmem>>, vector<16x128xf32>,
    return
  }
  func.func @transform_0(%arg0: i32) -> (i32, i32) {
    %c0_i32 = arith.constant 0 : i32
    %c0_i32_0 = arith.constant 0 : i32
    return %arg0, %c0_i32 : i32, i32
  }
  func.func @transform_1(%arg0: i32) -> (i32, i32) {
    %c0_i32 = arith.constant 0 : i32
    %c0_i32_0 = arith.constant 0 : i32
    %c0_i32_1 = arith.constant 0 : i32
    return %c0_i32, %c0_i32_0 : i32, i32
  }
  func.func @transform_2(%arg0: i32) -> (i32, i32) {
    %c0_i32 = arith.constant 0 : i32
    %c0_i32_0 = arith.constant 0 : i32
    %c0_i32_1 = arith.constant 0 : i32
    return %c0_i32, %c0_i32_0 : i32, i32
  }
  func.func @transform_3(%arg0: i32) -> (i32, i32) {
    %c0_i32 = arith.constant 0 : i32
    %c0_i32_0 = arith.constant 0 : i32
    %c0_i32_1 = arith.constant 0 : i32
    return %c0_i32, %c0_i32_0 : i32, i32
  }
  func.func @transform_4(%arg0: i32) -> (i32, i32) {
    %c0_i32 = arith.constant 0 : i32
    %c0_i32_0 = arith.constant 0 : i32
    %c0_i32_1 = arith.constant 0 : i32
    return %c0_i32, %c0_i32_0 : i32, i32
  }
  func.func @transform_5(%arg0: i32) -> (i32, i32) {
    %c0_i32 = arith.constant 0 : i32
    %c0_i32_0 = arith.constant 0 : i32
    %c0_i32_1 = arith.constant 0 : i32
    return %c0_i32, %c0_i32_0 : i32, i32
  }
  func.func @transform_6(%arg0: i32) -> (i32, i32) {
    %c0_i32 = arith.constant 0 : i32
    %c0_i32_0 = arith.constant 0 : i32
    %c0_i32_1 = arith.constant 0 : i32
    return %c0_i32, %c0_i32_0 : i32, i32
  }
  func.func @transform_7(%arg0: i32) -> (i32, i32) {
    %c0_i32 = arith.constant 0 : i32
    %c0_i32_0 = arith.constant 0 : i32
    return %arg0, %c0_i32 : i32, i32
  }
}

</mosaic_0001>

<llo_original>
// kernel: audio_classifier_forward.1
$region0: #{audio_classifier_forward.1}
  #allocation0 [shape = 'u32[]', space=smem, size = 0x4, offset = 0x4, fixed_abs, tag = 'smem constant byte address 0x4 - core index']
  #allocation1 [shape = 'u32[72,128]{1,0:T(1,128)}', space=vmem, size = 0x9000, scoped, tag = 'internal scratch']
  %s0 = inlined_call_operand.vmem [shape: f32[16,32], index: 0, kind: input, shape index: {}]
  %s1 = inlined_call_operand.vmem [shape: bf16[32,128], index: 1, kind: input, shape index: {}]
  %s2 = inlined_call_operand.vmem [shape: f32[1,128], index: 2, kind: input, shape index: {}]
  %s3 = inlined_call_operand.hbm [shape: bf16[128,128], index: 3, kind: input, shape index: {}]
  %s4 = inlined_call_operand.vmem [shape: f32[1,128], index: 4, kind: input, shape index: {}]
  %s5 = inlined_call_operand.hbm [shape: bf16[128,128], index: 5, kind: input, shape index: {}]
  %s6 = inlined_call_operand.vmem [shape: f32[1,128], index: 6, kind: input, shape index: {}]
  %s7 = inlined_call_operand.vmem [shape: f32[16,128], index: 7, kind: output, shape index: {}]
  %s8 = sld [smem:[#allocation0]]
  $region46: #{audio_classifier_forward.1} parent=0
    _
  %s10 = ssub.s32 1, %s8
  %s11 = scalar_select 0, %s10, %s8
  $region1: #{audio_classifier_forward.1} parent=0
    #allocation2 [shape = 'u8[32768]{0}', space=vmem, size = 0x8000, scoped, tag = 'input window, operand 3, single buffered']
    #allocation3 [shape = 's32[1]{0}', space=sflag, size = 0x4, scoped, tag = 'scoped memory for audio_classifier_forward.1']
    #allocation4 [shape = 'u8[32768]{0}', space=vmem, size = 0x8000, scoped, tag = 'input window, operand 5, single buffered']
    #allocation5 [shape = 's32[1]{0}', space=sflag, size = 0x4, scoped, tag = 'scoped memory for audio_classifier_forward.1']
    %12 = vsyncpa [#allocation3], 0
    %13 = vsyncpa [#allocation5], 0
    // Predicated region
    $region2: #{audio_classifier_forward.1} parent=1 // pred_check
      _
    $region3: #{audio_classifier_forward.1} parent=1 // pred_check_branch
      %15 = sbr.rel (0) target = $region5
    $region4: #{audio_classifier_forward.1} parent=1 // pred_region
      _
    $region5: #{audio_classifier_forward.1} parent=1 // pred_fallthru
      _
    // Predicated region
    $region6: #{audio_classifier_forward.1} parent=1 // pred_check
      _
    $region7: #{audio_classifier_forward.1} parent=1 // pred_check_branch
      %17 = sbr.rel (0) target = $region9
    $region8: #{audio_classifier_forward.1} parent=1 // pred_region
      _
    $region9: #{audio_classifier_forward.1} parent=1 // pred_fallthru
      _
    // Predicated region
    $region10: #{audio_classifier_forward.1} parent=1 // pred_check
      _
    $region11: #{audio_classifier_forward.1} parent=1 // pred_check_branch
      %19 = sbr.rel (0) target = $region13
    $region12: #{audio_classifier_forward.1} parent=1 // pred_region
      _
    $region13: #{audio_classifier_forward.1} parent=1 // pred_fallthru
      _
    // Predicated region
    $region14: #{audio_classifier_forward.1} parent=1 // pred_check
      _
    $region15: #{audio_classifier_forward.1} parent=1 // pred_check_branch
      %21 = sbr.rel (0) target = $region17
    $region16: #{audio_classifier_forward.1} parent=1 // pred_region
      %23 = vsyncadd [#allocation3], 0
      %s24 = sshll.u32 %s3, 4
      %s25 = int_to_ptr.hbm [resolvable:$true] %s24
      %s26 = sshll.u32 [#allocation2], 4
      %s27 = int_to_ptr.vmem [resolvable:$true] %s26
      %32 = dma.hbm_to_vmem [thread:$0]  %s25, 1024, %s27, [#allocation3], 64, 64, 4
    $region17: #{audio_classifier_forward.1} parent=1 // pred_fallthru
      _
    // Predicated region
    $region18: #{audio_classifier_forward.1} parent=1 // pred_check
      _
    $region19: #{audio_classifier_forward.1} parent=1 // pred_check_branch
      %34 = sbr.rel (0) target = $region21
    $region20: #{audio_classifier_forward.1} parent=1 // pred_region
      _
    $region21: #{audio_classifier_forward.1} parent=1 // pred_fallthru
      _
    // Predicated region
    $region22: #{audio_classifier_forward.1} parent=1 // pred_check
      _
    $region23: #{audio_classifier_forward.1} parent=1 // pred_check_branch
      %36 = sbr.rel (0) target = $region25
    $region24: #{audio_classifier_forward.1} parent=1 // pred_region
      %38 = vsyncadd [#allocation5], 0
      %s39 = sshll.u32 %s5, 4
      %s40 = int_to_ptr.hbm [resolvable:$true] %s39
      %s41 = sshll.u32 [#allocation4], 4
      %s42 = int_to_ptr.vmem [resolvable:$true] %s41
      %47 = dma.hbm_to_vmem [thread:$0]  %s40, 1024, %s42, [#allocation5], 64, 64, 4
    $region25: #{audio_classifier_forward.1} parent=1 // pred_fallthru
      _
    // Predicated region
    $region26: #{audio_classifier_forward.1} parent=1 // pred_check
      _
    $region27: #{audio_classifier_forward.1} parent=1 // pred_check_branch
      %49 = sbr.rel (0) target = $region29
    $region28: #{audio_classifier_forward.1} parent=1 // pred_region
      _
    $region29: #{audio_classifier_forward.1} parent=1 // pred_fallthru
      _
    // Predicated region
    $region30: #{audio_classifier_forward.1} parent=1 // pred_check
      _
    $region31: #{audio_classifier_forward.1} parent=1 // pred_check_branch
      %51 = sbr.rel (0) target = $region33
    $region32: #{audio_classifier_forward.1} parent=1 // pred_region
      %53 = dma.done [#allocation3], 1024
    $region33: #{audio_classifier_forward.1} parent=1 // pred_fallthru
      _
    // Predicated region
    $region34: #{audio_classifier_forward.1} parent=1 // pred_check
      _
    $region35: #{audio_classifier_forward.1} parent=1 // pred_check_branch
      %55 = sbr.rel (0) target = $region37
    $region36: #{audio_classifier_forward.1} parent=1 // pred_region
      %57 = dma.done [#allocation5], 1024
    $region37: #{audio_classifier_forward.1} parent=1 // pred_fallthru
      _
    %v59 = vld [vmem:[%s0] sm:$0xff]
    %v60 = vld [vmem:[%s0 + $0x8] sm:$0xff]
    %v61 = vpack.c.bf16 %v60, %v59
    %v62 = vld [vmem:[%s1] sm:$0xf]
    %v63 = vld [vmem:[%s1 + $0x4] sm:$0xf]
    %v64 = vld [vmem:[%s1 + $0x8] sm:$0xf]
    %v65 = vld [vmem:[%s1 + $0xc] sm:$0xf]
    %v66 = vld [vmem:[%s2] sm:$0x1]
    %v68 = vperm.slane %v66, 0
    %v74 = vunpack.c.l.b16 %v62
    %v75 = vunpack.c.l.b16 %v63
    %v76 = vunpack.c.l.b16 %v64
    %v77 = vunpack.c.l.b16 %v65
    %v78 = vpack.c.b16 %v75, %v74
    %v79 = vpack.c.b16 %v77, %v76
    %vm82 = vcmask 261120
    %v84 = vsel %vm82, %v61, 0
    %86 = vmatpush.bf16.msra.mxu0 0
    %87 = vmatpush.bf16.msra.mxu0 0
    %88 = vmatpush.bf16.msra.mxu0 0
    %89 = vmatpush.bf16.msra.mxu0 0
    %90 = vmatpush.bf16.msra.mxu0 0
    %91 = vmatpush.bf16.msra.mxu0 0
    %92 = vmatpush.bf16.msra.mxu0 %v79
    %93 = vmatpush.bf16.msra.mxu0 %v78
    %94 = vmatmul.bf16.gmra.mxu0 %v84
    %v95 = vpop.f32.mrf.mxu0
    %v96 = vadd.f32 %v68, %v95
    %v97 = vpop.f32.mrf.mxu0
    %v98 = vadd.f32 %v68, %v97
    %99 = vdwg.mxu0
    %v100 = vmax.f32 %v96, 0.0
    %v101 = vmax.f32 %v98, 0.0
    %v102 = vpack.c.bf16 %v101, %v100
    %v103 = vld [vmem:[#allocation2] sm:$0xf]
    %v104 = vld [vmem:[#allocation2 + $0x4] sm:$0xf]
    %v105 = vld [vmem:[#allocation2 + $0x8] sm:$0xf]
    %v106 = vld [vmem:[#allocation2 + $0xc] sm:$0xf]
    %v107 = vld [vmem:[#allocation2 + $0x10] sm:$0xf]
    %v108 = vld [vmem:[#allocation2 + $0x14] sm:$0xf]
    %v109 = vld [vmem:[#allocation2 + $0x18] sm:$0xf]
    %v110 = vld [vmem:[#allocation2 + $0x1c] sm:$0xf]
    %v111 = vld [vmem:[#allocation2 + $0x20] sm:$0xf]
    %v112 = vld [vmem:[#allocation2 + $0x24] sm:$0xf]
    %v113 = vld [vmem:[#allocation2 + $0x28] sm:$0xf]
    %v114 = vld [vmem:[#allocation2 + $0x2c] sm:$0xf]
    %v115 = vld [vmem:[#allocation2 + $0x30] sm:$0xf]
    %v116 = vld [vmem:[#allocation2 + $0x34] sm:$0xf]
    %v117 = vld [vmem:[#allocation2 + $0x38] sm:$0xf]
    %v118 = vld [vmem:[#allocation2 + $0x3c] sm:$0xf]
    %v119 = vld [vmem:[%s4] sm:$0x1]
    %v121 = vperm.slane %v119, 0
    %v139 = vunpack.c.l.b16 %v103
    %v140 = vunpack.c.l.b16 %v104
    %v141 = vunpack.c.l.b16 %v105
    %v142 = vunpack.c.l.b16 %v106
    %v143 = vunpack.c.l.b16 %v107
    %v144 = vunpack.c.l.b16 %v108
    %v145 = vunpack.c.l.b16 %v109
    %v146 = vunpack.c.l.b16 %v110
    %v147 = vunpack.c.l.b16 %v111
    %v148 = vunpack.c.l.b16 %v112
    %v149 = vunpack.c.l.b16 %v113
    %v150 = vunpack.c.l.b16 %v114
    %v151 = vunpack.c.l.b16 %v115
    %v152 = vunpack.c.l.b16 %v116
    %v153 = vunpack.c.l.b16 %v117
    %v154 = vunpack.c.l.b16 %v118
    %v155 = vpack.c.b16 %v140, %v139
    %v156 = vpack.c.b16 %v142, %v141
    %v157 = vpack.c.b16 %v144, %v143
    %v158 = vpack.c.b16 %v146, %v145
    %v159 = vpack.c.b16 %v148, %v147
    %v160 = vpack.c.b16 %v150, %v149
    %v161 = vpack.c.b16 %v152, %v151
    %v162 = vpack.c.b16 %v154, %v153
    %171 = vmatpush.bf16.msra.mxu0 %v162
    %172 = vmatpush.bf16.msra.mxu0 %v161
    %173 = vmatpush.bf16.msra.mxu0 %v160
    %174 = vmatpush.bf16.msra.mxu0 %v159
    %175 = vmatpush.bf16.msra.mxu0 %v158
    %176 = vmatpush.bf16.msra.mxu0 %v157
    %177 = vmatpush.bf16.msra.mxu0 %v156
    %178 = vmatpush.bf16.msra.mxu0 %v155
    %179 = vmatmul.bf16.gmra.mxu0 %v102
    %v180 = vpop.f32.mrf.mxu0
    %v181 = vadd.f32 %v121, %v180
    %v182 = vpop.f32.mrf.mxu0
    %v183 = vadd.f32 %v121, %v182
    %184 = vdwg.mxu0
    %v185 = vmax.f32 %v181, 0.0
    %v186 = vmax.f32 %v183, 0.0
    %v187 = vpack.c.bf16 %v186, %v185
    %v188 = vld [vmem:[#allocation4] sm:$0xf]
    %v189 = vld [vmem:[#allocation4 + $0x4] sm:$0xf]
    %v190 = vld [vmem:[#allocation4 + $0x8] sm:$0xf]
    %v191 = vld [vmem:[#allocation4 + $0xc] sm:$0xf]
    %v192 = vld [vmem:[#allocation4 + $0x10] sm:$0xf]
    %v193 = vld [vmem:[#allocation4 + $0x14] sm:$0xf]
    %v194 = vld [vmem:[#allocation4 + $0x18] sm:$0xf]
    %v195 = vld [vmem:[#allocation4 + $0x1c] sm:$0xf]
    %v196 = vld [vmem:[#allocation4 + $0x20] sm:$0xf]
    %v197 = vld [vmem:[#allocation4 + $0x24] sm:$0xf]
    %v198 = vld [vmem:[#allocation4 + $0x28] sm:$0xf]
    %v199 = vld [vmem:[#allocation4 + $0x2c] sm:$0xf]
    %v200 = vld [vmem:[#allocation4 + $0x30] sm:$0xf]
    %v201 = vld [vmem:[#allocation4 + $0x34] sm:$0xf]
    %v202 = vld [vmem:[#allocation4 + $0x38] sm:$0xf]
    %v203 = vld [vmem:[#allocation4 + $0x3c] sm:$0xf]
    %v204 = vld [vmem:[%s6] sm:$0x1]
    %v206 = vperm.slane %v204, 0
    %v224 = vunpack.c.l.b16 %v188
    %v225 = vunpack.c.l.b16 %v189
    %v226 = vunpack.c.l.b16 %v190
    %v227 = vunpack.c.l.b16 %v191
    %v228 = vunpack.c.l.b16 %v192
    %v229 = vunpack.c.l.b16 %v193
    %v230 = vunpack.c.l.b16 %v194
    %v231 = vunpack.c.l.b16 %v195
    %v232 = vunpack.c.l.b16 %v196
    %v233 = vunpack.c.l.b16 %v197
    %v234 = vunpack.c.l.b16 %v198
    %v235 = vunpack.c.l.b16 %v199
    %v236 = vunpack.c.l.b16 %v200
    %v237 = vunpack.c.l.b16 %v201
    %v238 = vunpack.c.l.b16 %v202
    %v239 = vunpack.c.l.b16 %v203
    %v240 = vpack.c.b16 %v225, %v224
    %v241 = vpack.c.b16 %v227, %v226
    %v242 = vpack.c.b16 %v229, %v228
    %v243 = vpack.c.b16 %v231, %v230
    %v244 = vpack.c.b16 %v233, %v232
    %v245 = vpack.c.b16 %v235, %v234
    %v246 = vpack.c.b16 %v237, %v236
    %v247 = vpack.c.b16 %v239, %v238
    %256 = vmatpush.bf16.msra.mxu0 %v247
    %257 = vmatpush.bf16.msra.mxu0 %v246
    %258 = vmatpush.bf16.msra.mxu0 %v245
    %259 = vmatpush.bf16.msra.mxu0 %v244
    %260 = vmatpush.bf16.msra.mxu0 %v243
    %261 = vmatpush.bf16.msra.mxu0 %v242
    %262 = vmatpush.bf16.msra.mxu0 %v241
    %263 = vmatpush.bf16.msra.mxu0 %v240
    %264 = vmatmul.bf16.gmra.mxu0 %v187
    %v265 = vpop.f32.mrf.mxu0
    %v266 = vadd.f32 %v206, %v265
    %v267 = vpop.f32.mrf.mxu0
    %v268 = vadd.f32 %v206, %v267
    %269 = vdwg.mxu0
    %v270 = vlaneseq
    %v271 = vand.u32 %v270, 127
    %vm272 = vcmp.lt.s32.totalorder %v271, 10
    %v273 = vsel %vm272, %v266, -1e+30
    %v274 = vsel %vm272, %v268, -1e+30
    %275 = vmax.xlane.f32.xlu0 %v273
    %v276 = vpop.xlane.xlu0 %275
    %277 = vmax.xlane.f32.xlu0 %v274
    %v278 = vpop.xlane.xlu0 %277
    %v279 = vsub.f32 %v273, %v276
    %v280 = vsub.f32 %v274, %v278
    %v281 = vmul.f32 %v279, 1.442695
    %v282 = vpow.pop %v281
    %v283 = vmul.f32 %v280, 1.442695
    %v284 = vpow.pop %v283
    %285 = vadd.xlane.f32.xlu0 %v282
    %v286 = vpop.xlane.xlu0 %285
    %287 = vadd.xlane.f32.xlu0 %v284
    %v288 = vpop.xlane.xlu0 %287
    %v289 = vlog2.pop %v286
    %v290 = vmul.f32 %v289, 0.6931472
    %v291 = vlog2.pop %v288
    %v292 = vmul.f32 %v291, 0.6931472
    %v293 = vsub.f32 %v279, %v290
    %v294 = vsub.f32 %v280, %v292
    %295 = vst [vmem:[%s7] sm:$0xff] %v293
    %296 = vst [vmem:[%s7 + $0x8] sm:$0xff] %v294
    // Predicated region
    $region38: #{audio_classifier_forward.1} parent=1 // pred_check
      _
    $region39: #{audio_classifier_forward.1} parent=1 // pred_check_branch
      %298 = sbr.rel (0) target = $region41
    $region40: #{audio_classifier_forward.1} parent=1 // pred_region
      _
    $region41: #{audio_classifier_forward.1} parent=1 // pred_fallthru
      _
    // Predicated region
    $region42: #{audio_classifier_forward.1} parent=1 // pred_check
      _
    $region43: #{audio_classifier_forward.1} parent=1 // pred_check_branch
      %300 = sbr.rel (0) target = $region45
    $region44: #{audio_classifier_forward.1} parent=1 // pred_region
      _
    $region45: #{audio_classifier_forward.1} parent=1 // pred_fallthru
      _
    %301 = vsyncpa [#allocation3], 1
    %302 = vsyncpa [#allocation5], 1

</llo_original>
